<compile_context>
chip_gen: v5e
topology: v5e:2x2
jax: 0.10.0
libtpu: 0.0.40
codegen_flags: <defaults>
</compile_context>

<pallas_src>
import functools

import jax
import jax.numpy as jnp
from jax import lax
from jax.experimental import pallas as pl
from jax.experimental.pallas import tpu as pltpu

NUM_CLASS = 20
MAT_DIFF_LOSS_SCALE = 0.001
_LANES = 128  # each partition emits one lane-dense partial-sum row


def _round_up(x, m):
    return ((x + m - 1) // m) * m


def _relation_loss_kernel(pred_ref, target_ref, trans_ref, out_ref, acc_ref, *,
                          batch, chunk_rows):
    """Accumulate per-tile partial sums into a resident VMEM scratch:
       lane 0 = sum of BCE elements, lane 1 = sum of per-row Frobenius norms."""
    p = pl.program_id(0)            # partition (parallel across TCs on v7x)
    s = pl.program_id(1)            # batch-tile reduction step within partition
    n_steps = pl.num_programs(1)

    tb, c = pred_ref.shape
    d = trans_ref.shape[-1]
    row0 = (p * n_steps + s) * tb   # first logical batch row of this tile

    @pl.when(s == 0)
    def _():
        acc_ref[...] = jnp.zeros_like(acc_ref)

    # ---- binary_cross_entropy(pred, one_hot(target)): element sum ----------
    pred = pred_ref[...].astype(jnp.float32)          # (TB, C)
    target = target_ref[...]                          # (TB, 1) int32
    cls_iota = lax.broadcasted_iota(jnp.int32, (tb, c), 1)
    one_hot = (cls_iota == target).astype(jnp.float32)
    log_p = jnp.maximum(jnp.log(pred), -100.0)        # PyTorch BCE log clamp
    log_1mp = jnp.maximum(jnp.log(1.0 - pred), -100.0)
    bce_el = -(one_hot * log_p + (1.0 - one_hot) * log_1mp)
    rows = row0 + lax.broadcasted_iota(jnp.int32, (tb, 1), 0)
    # where-masking (not multiply) so NaN/Inf from out-of-bounds tail rows cannot leak
    ce_tile = jnp.sum(jnp.where(rows < batch, bce_el, 0.0))

    # ---- feature_transform_regularizer: sum_b ||A_b A_b^T - I||_F ----------
    # Identity: ||G - I||_F^2 = sum(G^2) - 2*sum(A^2) + D, with G = A A^T.
    # Chunked so the lane-padded (rc, D, D) f32 gram stays small in VMEM.
    # TODO(synk): optional MXU g-packing (2/4 batch matrices per pass) skipped:
    # the kernel is HBM-bandwidth-bound and compute is already hidden under DMA.
    n_chunks = tb // chunk_rows

    def fro_chunk(ci, fro_acc):
        start = pl.multiple_of(ci * chunk_rows, chunk_rows)
        a = trans_ref[pl.ds(start, chunk_rows), :, :]          # (rc, D, D) native dtype
        gram = lax.dot_general(                                 # A @ A^T, f32 acc on MXU
            a, a, dimension_numbers=(((2,), (2,)), ((0,), (0,))),
            preferred_element_type=jnp.float32)                 # (rc, D, D) f32
        g2 = jnp.sum(jnp.sum(gram * gram, axis=2), axis=1, keepdims=True)   # (rc, 1)
        a32 = a.astype(jnp.float32)
        a2 = jnp.sum(jnp.sum(a32 * a32, axis=2), axis=1, keepdims=True)     # (rc, 1)
        fro2 = jnp.maximum(g2 - 2.0 * a2 + jnp.float32(d), 0.0)
        fro = jnp.sqrt(fro2)                                                # (rc, 1)
        crows = row0 + start + lax.broadcasted_iota(jnp.int32, (chunk_rows, 1), 0)
        return fro_acc + jnp.sum(jnp.where(crows < batch, fro, 0.0))

    fro_tile = lax.fori_loop(0, n_chunks, fro_chunk, jnp.zeros((), jnp.float32))

    # ---- accumulate into the resident VMEM scratch --------------------------
    lane = lax.broadcasted_iota(jnp.int32, acc_ref.shape, 2)
    acc_ref[...] += (jnp.where(lane == 0, ce_tile, 0.0)
                     + jnp.where(lane == 1, fro_tile, 0.0))

    @pl.when(s == n_steps - 1)
    def _():
        out_ref[...] = acc_ref[...]   # single lane-dense write per partition


def _device_kind():
    try:
        return jax.devices()[0].device_kind.lower()
    except Exception:
        return ""


def _default_num_core_splits():
    # Only v7x has 2 TensorCores/chip; the partition axis is pure overhead on v5e/v6e.
    return 2 if "v7" in _device_kind() else 1


def _default_tile_bytes():
    # v7x: 64 MiB VMEM/TC -> nominal ~4 MiB trans tile (8 MiB after 64->128 lane pad).
    # v5e/v6e: 128 MiB VMEM -> nominal ~8 MiB tile.
    return (4 << 20) if ("v7" in _device_kind() or _device_kind() == "") else (8 << 20)


def relation_loss(pred, target, trans_feat, *, block_rows=None, num_core_splits=None):
    """RelationLoss.forward(pred, target, trans_feat) -> scalar total loss."""
    b, c = pred.shape
    d = trans_feat.shape[-1]
    assert trans_feat.shape == (b, d, d)

    target2d = target.astype(jnp.int32).reshape(b, 1)

    titem = jnp.dtype(trans_feat.dtype).itemsize
    if block_rows is None:
        block_rows = max(128, _default_tile_bytes() // (d * d * titem))
    block_rows = max(8, int(block_rows))
    block_rows = (_round_up(block_rows, 128) if block_rows > 128
                  else _round_up(block_rows, 8))

    # Tile rows: full batch in one block when it fits (block == full dim, no pad),
    # otherwise a block_rows tile (multiple of 8 / 128) with a masked partial tail.
    if b <= 128:
        tb = min(block_rows, b)
    else:
        tb = min(block_rows, _round_up(b, 128))
    chunk_rows = tb if tb <= 128 else 128          # divides tb by construction

    if num_core_splits is None:
        num_core_splits = _default_num_core_splits()
    n_blocks = pl.cdiv(b, tb)
    parts = (num_core_splits
             if (num_core_splits > 1 and n_blocks % num_core_splits == 0) else 1)
    steps = n_blocks // parts

    kernel = functools.partial(_relation_loss_kernel, batch=b, chunk_rows=chunk_rows)

    # Explicit VMEM budget, accounting for 64->128 lane padding of blocks/intermediates.
    lane_pad = lambda n: _round_up(n, _LANES)
    trans_blk = tb * d * lane_pad(d) * titem
    pred_blk = tb * lane_pad(c) * 4
    tgt_blk = tb * lane_pad(1) * 4
    inner_tmp = 3 * chunk_rows * d * lane_pad(d) * 4      # gram + squares + f32 cast
    bce_tmp = 4 * tb * lane_pad(c) * 4
    vmem_limit = int(2 * (trans_blk + pred_blk + tgt_blk)  # double-buffered inputs
                     + inner_tmp + bce_tmp + (4 << 20))

    partials = pl.pallas_call(
        kernel,
        out_shape=jax.ShapeDtypeStruct((parts, 1, _LANES), jnp.float32),
        grid_spec=pltpu.PrefetchScalarGridSpec(
            num_scalar_prefetch=0,
            grid=(parts, steps),
            in_specs=[
                pl.BlockSpec((tb, c), lambda p, s: (p * steps + s, 0)),
                pl.BlockSpec((tb, 1), lambda p, s: (p * steps + s, 0)),
                pl.BlockSpec((tb, d, d), lambda p, s: (p * steps + s, 0, 0)),
            ],
            out_specs=pl.BlockSpec((1, 1, _LANES), lambda p, s: (p, 0, 0)),
            scratch_shapes=[pltpu.VMEM((1, 1, _LANES), jnp.float32)],
        ),
        compiler_params=pltpu.CompilerParams(
            dimension_semantics=("parallel", "arbitrary"),
            vmem_limit_bytes=vmem_limit,
        ),
    )(pred, target2d, trans_feat)

    ce_sum = jnp.sum(partials[:, 0, 0])
    fro_sum = jnp.sum(partials[:, 0, 1])
    ce_loss = ce_sum / (b * c)
    mat_diff_loss = fro_sum / b
    # TODO(synk): the PyTorch module's AverageMeter tracking of ce_loss is host-side
    # stateful bookkeeping and is not part of the returned loss.
    return mat_diff_loss * MAT_DIFF_LOSS_SCALE + ce_loss


def relation_loss_ref(pred, target, trans_feat, num_class=NUM_CLASS):
    """Pure-JAX reference for correctness checking."""
    p = pred.astype(jnp.float32)
    one_hot = jax.nn.one_hot(target, num_class, dtype=jnp.float32)
    log_p = jnp.maximum(jnp.log(p), -100.0)
    log_1mp = jnp.maximum(jnp.log(1.0 - p), -100.0)
    ce = jnp.mean(-(one_hot * log_p + (1.0 - one_hot) * log_1mp))
    t = trans_feat.astype(jnp.float32)
    d = t.shape[-1]
    gram = jnp.einsum('bij,bkj->bik', t, t)
    diff = gram - jnp.eye(d, dtype=jnp.float32)[None]
    mat = jnp.mean(jnp.sqrt(jnp.sum(diff * diff, axis=(1, 2))))
    return mat * MAT_DIFF_LOSS_SCALE + ce


if __name__ == "__main__":
    key = jax.random.PRNGKey(0)
    ks = jax.random.split(key, 9)
    C, D = NUM_CLASS, 64

    def make_case(kp, kt, ka, batch):
        pred = jax.nn.sigmoid(jax.random.normal(kp, (batch, C), dtype=jnp.float32))
        tgt = jax.random.randint(kt, (batch,), 0, C, dtype=jnp.int32)
        trans = (jnp.eye(D, dtype=jnp.float32)[None]
                 + 0.05 * jax.random.normal(ka, (batch, D, D), dtype=jnp.float32))
        return pred, tgt, trans

    # --- case 1: tiny batch, single tile (matches the module's usual call) ---
    pred1, tgt1, trans1 = make_case(ks[0], ks[1], ks[2], 2)
    out1 = jax.block_until_ready(relation_loss(pred1, tgt1, trans1))
    ref1 = relation_loss_ref(pred1, tgt1, trans1)
    assert jnp.allclose(out1, ref1, rtol=2e-5, atol=2e-5), (out1, ref1)

    # --- case 2: multi-step grid with a partial (where-masked) tail block ---
    pred2, tgt2, trans2 = make_case(ks[3], ks[4], ks[5], 20)
    out2 = jax.block_until_ready(relation_loss(pred2, tgt2, trans2, block_rows=8))
    ref2 = relation_loss_ref(pred2, tgt2, trans2)
    assert jnp.allclose(out2, ref2, rtol=2e-5, atol=2e-5), (out2, ref2)

    # --- case 3: 2-way partition axis engaged (even block count) ---
    pred3, tgt3, trans3 = make_case(ks[6], ks[7], ks[8], 32)
    out3 = jax.block_until_ready(
        relation_loss(pred3, tgt3, trans3, block_rows=8, num_core_splits=2))
    ref3 = relation_loss_ref(pred3, tgt3, trans3)
    assert jnp.allclose(out3, ref3, rtol=2e-5, atol=2e-5), (out3, ref3)

    # --- case 4: bf16 trans_feat passes straight through to the MXU ---
    trans2_bf16 = trans2.astype(jnp.bfloat16)
    out4 = jax.block_until_ready(relation_loss(pred2, tgt2, trans2_bf16, block_rows=8))
    ref4 = relation_loss_ref(pred2, tgt2, trans2_bf16)
    assert jnp.allclose(out4, ref4, rtol=2e-3, atol=2e-4), (out4, ref4)

    print("KERNEL_OK")
</pallas_src>

<mosaic_0001>
module attributes {stable_mosaic.version = 11 : i64} {
  func.func @_relation_loss_kernel(%arg0: i32, %arg1: i32, %arg2: memref<2x20xf32, #tpu.memory_space<vmem>>, %arg3: memref<2x1xi32, #tpu.memory_space<vmem>>, %arg4: memref<2x64x64xf32, #tpu.memory_space<vmem>>, %arg5: memref<1x1x128xf32, #tpu.memory_space<vmem>>, %arg6: memref<1x1x128xf32, #tpu.memory_space<vmem>>) attributes {dimension_semantics = [#tpu.dimension_semantics<parallel>, #tpu.dimension_semantics<arbitrary>], iteration_bounds = array<i64: 1, 1>, scalar_prefetch = 0 : i64, scratch_operands = 1 : i64, tpu.core_type = #tpu.core_type<tc>, window_params = [{transform_indices = @transform_0, window_bounds = array<i64: 2, 20>}, {transform_indices = @transform_1, window_bounds = array<i64: 2, 1>}, {transform_indices = @transform_2, window_bounds = array<i64: 2, 64, 64>}, {transform_indices = @transform_3, window_bounds = array<i64: 1, 1, 128>}]} {
    %c1_i32 = arith.constant 1 : i32
    %0 = arith.muli %arg0, %c1_i32 : i32
    %1 = arith.addi %0, %arg1 : i32
    %c2_i32 = arith.constant 2 : i32
    %2 = arith.muli %1, %c2_i32 : i32
    %c0_i32 = arith.constant 0 : i32
    %3 = arith.cmpi eq, %arg1, %c0_i32 : i32
    %4 = arith.extui %3 : i1 to i32
    %c0_i32_0 = arith.constant 0 : i32
    %5 = arith.cmpi ne, %4, %c0_i32_0 : i32
    scf.if %5 {
      %cst_40 = arith.constant 0.000000e+00 : f32
      %93 = vector.broadcast %cst_40 : f32 to vector<1x1x128xf32>
      %c0_41 = arith.constant 0 : index
      %c0_42 = arith.constant 0 : index
      %c0_43 = arith.constant 0 : index
      %94 = vector.load %arg6[%c0_41, %c0_42, %c0_43] : memref<1x1x128xf32, #tpu.memory_space<vmem>>, vector<1x1x128xf32>
      tpu.vector_store %arg6[%c0_41, %c0_42, %c0_43], %93 {strides = array<i32>} : memref<1x1x128xf32, #tpu.memory_space<vmem>>, vector<1x1x128xf32>,
    } else {
    }
    %c0 = arith.constant 0 : index
    %c0_1 = arith.constant 0 : index
    %6 = vector.load %arg2[%c0, %c0_1] : memref<2x20xf32, #tpu.memory_space<vmem>>, vector<2x20xf32>
    %c0_2 = arith.constant 0 : index
    %c0_3 = arith.constant 0 : index
    %7 = vector.load %arg3[%c0_2, %c0_3] : memref<2x1xi32, #tpu.memory_space<vmem>>, vector<2x1xi32>
    %8 = tpu.iota {dimensions = array<i32: 1>} : vector<2x20xi32>
    %9 = vector.broadcast %7 : vector<2x1xi32> to vector<2x20xi32>
    %10 = arith.cmpi eq, %8, %9 : vector<2x20xi32>
    %11 = arith.extui %10 : vector<2x20xi1> to vector<2x20xi32>
    %12 = arith.sitofp %11 : vector<2x20xi32> to vector<2x20xf32>
    %13 = math.log %6 : vector<2x20xf32>
    %cst = arith.constant -1.000000e+02 : f32
    %14 = vector.broadcast %cst : f32 to vector<2x20xf32>
    %15 = arith.maximumf %13, %14 : vector<2x20xf32>
    %cst_4 = arith.constant 1.000000e+00 : f32
    %16 = vector.broadcast %cst_4 : f32 to vector<2x20xf32>
    %17 = arith.subf %16, %6 : vector<2x20xf32>
    %18 = math.log %17 : vector<2x20xf32>
    %cst_5 = arith.constant -1.000000e+02 : f32
    %19 = vector.broadcast %cst_5 : f32 to vector<2x20xf32>
    %20 = arith.maximumf %18, %19 : vector<2x20xf32>
    %21 = arith.mulf %12, %15 : vector<2x20xf32>
    %cst_6 = arith.constant 1.000000e+00 : f32
    %22 = vector.broadcast %cst_6 : f32 to vector<2x20xf32>
    %23 = arith.subf %22, %12 : vector<2x20xf32>
    %24 = arith.mulf %23, %20 : vector<2x20xf32>
    %25 = arith.addf %21, %24 : vector<2x20xf32>
    %cst_7 = arith.constant 0.000000e+00 : f32
    %26 = vector.broadcast %cst_7 : f32 to vector<2x20xf32>
    %27 = arith.subf %26, %25 : vector<2x20xf32>
    %28 = tpu.iota {dimensions = array<i32: 0>} : vector<2x1xi32>
    %29 = vector.broadcast %2 : i32 to vector<2x1xi32>
    %30 = arith.addi %29, %28 : vector<2x1xi32>
    %c2_i32_8 = arith.constant 2 : i32
    %31 = vector.broadcast %c2_i32_8 : i32 to vector<2x1xi32>
    %32 = arith.cmpi slt, %30, %31 : vector<2x1xi32>
    %cst_9 = arith.constant 0.000000e+00 : f32
    %33 = vector.shape_cast %32 : vector<2x1xi1> to vector<2x1xi1>
    %34 = vector.broadcast %33 : vector<2x1xi1> to vector<2x20xi1>
    %35 = vector.broadcast %cst_9 : f32 to vector<2x20xf32>
    %36 = arith.select %34, %27, %35 : vector<2x20xi1>, vector<2x20xf32>
    %37 = vector.shape_cast %36 : vector<2x20xf32> to vector<1x2x20xf32>
    %cst_10 = arith.constant dense<0.000000e+00> : vector<1xf32>
    %38 = vector.multi_reduction <add>, %37, %cst_10 [1, 2] : vector<1x2x20xf32> to vector<1xf32>
    %39 = vector.shape_cast %38 : vector<1xf32> to vector<1x1x1xf32>
    %40 = vector.extract %39[0, 0, 0] : f32 from vector<1x1x1xf32>
    %cst_11 = arith.constant 0.000000e+00 : f32
    %c0_i32_12 = arith.constant 0 : i32
    %c2_i32_13 = arith.constant 2 : i32
    %41 = arith.muli %c0_i32_12, %c2_i32_13 : i32
    %42 = tpu.assume_multiple %41, 2 : i32
    %43 = arith.index_cast %42 : i32 to index
    %c0_14 = arith.constant 0 : index
    %c0_15 = arith.constant 0 : index
    %44 = vector.load %arg4[%43, %c0_14, %c0_15] : memref<2x64x64xf32, #tpu.memory_space<vmem>>, vector<2x64x64xf32>
    %cst_16 = arith.constant dense<0.000000e+00> : vector<2x64x64xf32>
    %45 = tpu.matmul %44, %44, %cst_16 {dimension_numbers = #tpu.dot_dimension_numbers<[2], [2], [1], [1], [0, 0, 0, 1, 1, 1], [0], [0]>} : vector<2x64x64xf32>, vector<2x64x64xf32>, vector<2x64x64xf32> -> vector<2x64x64xf32>
    %46 = arith.mulf %45, %45 : vector<2x64x64xf32>
    %cst_17 = arith.constant dense<0.000000e+00> : vector<2x64xf32>
    %47 = vector.multi_reduction <add>, %46, %cst_17 [2] : vector<2x64x64xf32> to vector<2x64xf32>
    %cst_18 = arith.constant dense<0.000000e+00> : vector<2xf32>
    %48 = vector.multi_reduction <add>, %47, %cst_18 [1] : vector<2x64xf32> to vector<2xf32>
    %49 = vector.shape_cast %48 : vector<2xf32> to vector<2x1xf32>
    %50 = arith.mulf %44, %44 : vector<2x64x64xf32>
    %cst_19 = arith.constant dense<0.000000e+00> : vector<2x64xf32>
    %51 = vector.multi_reduction <add>, %50, %cst_19 [2] : vector<2x64x64xf32> to vector<2x64xf32>
    %cst_20 = arith.constant dense<0.000000e+00> : vector<2xf32>
    %52 = vector.multi_reduction <add>, %51, %cst_20 [1] : vector<2x64xf32> to vector<2xf32>
    %53 = vector.shape_cast %52 : vector<2xf32> to vector<2x1xf32>
    %cst_21 = arith.constant 2.000000e+00 : f32
    %54 = vector.broadcast %cst_21 : f32 to vector<2x1xf32>
    %55 = arith.mulf %54, %53 : vector<2x1xf32>
    %56 = arith.subf %49, %55 : vector<2x1xf32>
    %cst_22 = arith.constant 6.400000e+01 : f32
    %57 = vector.broadcast %cst_22 : f32 to vector<2x1xf32>
    %58 = arith.addf %56, %57 : vector<2x1xf32>
    %cst_23 = arith.constant 0.000000e+00 : f32
    %59 = vector.broadcast %cst_23 : f32 to vector<2x1xf32>
    %60 = arith.maximumf %58, %59 : vector<2x1xf32>
    %61 = math.sqrt %60 : vector<2x1xf32>
    %62 = arith.addi %2, %42 : i32
    %63 = tpu.iota {dimensions = array<i32: 0>} : vector<2x1xi32>
    %64 = vector.broadcast %62 : i32 to vector<2x1xi32>
    %65 = arith.addi %64, %63 : vector<2x1xi32>
    %c2_i32_24 = arith.constant 2 : i32
    %66 = vector.broadcast %c2_i32_24 : i32 to vector<2x1xi32>
    %67 = arith.cmpi slt, %65, %66 : vector<2x1xi32>
    %cst_25 = arith.constant 0.000000e+00 : f32
    %68 = vector.broadcast %cst_25 : f32 to vector<2x1xf32>
    %69 = arith.select %67, %61, %68 : vector<2x1xi1>, vector<2x1xf32>
    %70 = vector.shape_cast %69 : vector<2x1xf32> to vector<1x2x1xf32>
    %cst_26 = arith.constant dense<0.000000e+00> : vector<1xf32>
    %71 = vector.multi_reduction <add>, %70, %cst_26 [1, 2] : vector<1x2x1xf32> to vector<1xf32>
    %72 = vector.shape_cast %71 : vector<1xf32> to vector<1x1x1xf32>
    %73 = vector.extract %72[0, 0, 0] : f32 from vector<1x1x1xf32>
    %74 = arith.addf %cst_11, %73 : f32
    %c1_i32_27 = arith.constant 1 : i32
    %75 = tpu.iota {dimensions = array<i32: 2>} : vector<1x1x128xi32>
    %c0_28 = arith.constant 0 : index
    %c0_29 = arith.constant 0 : index
    %c0_30 = arith.constant 0 : index
    %76 = vector.load %arg6[%c0_28, %c0_29, %c0_30] : memref<1x1x128xf32, #tpu.memory_space<vmem>>, vector<1x1x128xf32>
    %c0_i32_31 = arith.constant 0 : i32
    %77 = vector.broadcast %c0_i32_31 : i32 to vector<1x1x128xi32>
    %78 = arith.cmpi eq, %75, %77 : vector<1x1x128xi32>
    %cst_32 = arith.constant 0.000000e+00 : f32
    %79 = vector.broadcast %40 : f32 to vector<1x1x128xf32>
    %80 = vector.broadcast %cst_32 : f32 to vector<1x1x128xf32>
    %81 = arith.select %78, %79, %80 : vector<1x1x128xi1>, vector<1x1x128xf32>
    %c1_i32_33 = arith.constant 1 : i32
    %82 = vector.broadcast %c1_i32_33 : i32 to vector<1x1x128xi32>
    %83 = arith.cmpi eq, %75, %82 : vector<1x1x128xi32>
    %cst_34 = arith.constant 0.000000e+00 : f32
    %84 = vector.broadcast %74 : f32 to vector<1x1x128xf32>
    %85 = vector.broadcast %cst_34 : f32 to vector<1x1x128xf32>
    %86 = arith.select %83, %84, %85 : vector<1x1x128xi1>, vector<1x1x128xf32>
    %87 = arith.addf %81, %86 : vector<1x1x128xf32>
    %88 = arith.addf %76, %87 : vector<1x1x128xf32>
    %c0_35 = arith.constant 0 : index
    %c0_36 = arith.constant 0 : index
    %c0_37 = arith.constant 0 : index
    %89 = vector.load %arg6[%c0_35, %c0_36, %c0_37] : memref<1x1x128xf32, #tpu.memory_space<vmem>>, vector<1x1x128xf32>
    tpu.vector_store %arg6[%c0_35, %c0_36, %c0_37], %88 {strides = array<i32>} : memref<1x1x128xf32, #tpu.memory_space<vmem>>, vector<1x1x128xf32>,
    %c0_i32_38 = arith.constant 0 : i32
    %90 = arith.cmpi eq, %arg1, %c0_i32_38 : i32
    %91 = arith.extui %90 : i1 to i32
    %c0_i32_39 = arith.constant 0 : i32
    %92 = arith.cmpi ne, %91, %c0_i32_39 : i32
    scf.if %92 {
      %c0_40 = arith.constant 0 : index
      %c0_41 = arith.constant 0 : index
      %c0_42 = arith.constant 0 : index
      %93 = vector.load %arg6[%c0_40, %c0_41, %c0_42] : memref<1x1x128xf32, #tpu.memory_space<vmem>>, vector<1x1x128xf32>
      %c0_43 = arith.constant 0 : index
      %c0_44 = arith.constant 0 : index
      %c0_45 = arith.constant 0 : index
      %94 = vector.load %arg5[%c0_43, %c0_44, %c0_45] : memref<1x1x128xf32, #tpu.memory_space<vmem>>, vector<1x1x128xf32>
      tpu.vector_store %arg5[%c0_43, %c0_44, %c0_45], %93 {strides = array<i32>} : memref<1x1x128xf32, #tpu.memory_space<vmem>>, vector<1x1x128xf32>,
    } else {
    }
    return
  }
  func.func @transform_0(%arg0: i32, %arg1: i32) -> (i32, i32) {
    %c1_i32 = arith.constant 1 : i32
    %0 = arith.muli %arg0, %c1_i32 : i32
    %1 = arith.addi %0, %arg1 : i32
    %c0_i32 = arith.constant 0 : i32
    %c0_i32_0 = arith.constant 0 : i32
    return %1, %c0_i32 : i32, i32
  }
  func.func @transform_1(%arg0: i32, %arg1: i32) -> (i32, i32) {
    %c1_i32 = arith.constant 1 : i32
    %0 = arith.muli %arg0, %c1_i32 : i32
    %1 = arith.addi %0, %arg1 : i32
    %c0_i32 = arith.constant 0 : i32
    %c0_i32_0 = arith.constant 0 : i32
    return %1, %c0_i32 : i32, i32
  }
  func.func @transform_2(%arg0: i32, %arg1: i32) -> (i32, i32, i32) {
    %c1_i32 = arith.constant 1 : i32
    %0 = arith.muli %arg0, %c1_i32 : i32
    %1 = arith.addi %0, %arg1 : i32
    %c0_i32 = arith.constant 0 : i32
    %c0_i32_0 = arith.constant 0 : i32
    %c0_i32_1 = arith.constant 0 : i32
    return %1, %c0_i32, %c0_i32_0 : i32, i32, i32
  }
  func.func @transform_3(%arg0: i32, %arg1: i32) -> (i32, i32, i32) {
    %c0_i32 = arith.constant 0 : i32
    %c0_i32_0 = arith.constant 0 : i32
    %c0_i32_1 = arith.constant 0 : i32
    return %arg0, %c0_i32, %c0_i32_0 : i32, i32, i32
  }
}

</mosaic_0001>

<llo_original>
// kernel: tpu_custom_call.1
$region0: #{tpu_custom_call.1}
  #allocation0 [shape = 'u32[]', space=smem, size = 0x4, offset = 0x4, fixed_abs, tag = 'smem constant byte address 0x4 - core index']
  #allocation1 [shape = 'u32[72,128]{1,0:T(1,128)}', space=vmem, size = 0x9000, scoped, tag = 'internal scratch']
  #allocation2 [shape = 'f32[1,1,128]{2,1,0:T(1,128)}', space=vmem, size = 0x200, scoped, tag = 'scratch operand']
  %s0 = inlined_call_operand.vmem [shape: f32[2,20], index: 0, kind: input, shape index: {}]
  %s1 = inlined_call_operand.vmem [shape: s32[2,1], index: 1, kind: input, shape index: {}]
  %s2 = inlined_call_operand.hbm [shape: f32[2,64,64], index: 2, kind: input, shape index: {}]
  %s3 = inlined_call_operand.hbm [shape: f32[1,1,128], index: 3, kind: output, shape index: {}]
  %s4 = sld [smem:[#allocation0]]
  $region34: #{tpu_custom_call.1} parent=0
    _
  %s6 = ssub.s32 1, %s4
  %s7 = scalar_select 0, %s6, %s4
  $region1: #{tpu_custom_call.1} parent=0
    #allocation3 [shape = 'u8[65536]{0}', space=vmem, size = 0x10000, scoped, tag = 'input window, operand 2, single buffered']
    #allocation4 [shape = 's32[1]{0}', space=sflag, size = 0x4, scoped, tag = 'scoped memory for tpu_custom_call.1']
    #allocation5 [shape = 's32[1]{0}', space=sflag, size = 0x4, scoped, tag = 'scoped memory for tpu_custom_call.1']
    #allocation6 [shape = 'u8[512]{0}', space=vmem, size = 0x400, scoped, tag = 'output window, operand 0, single buffered']
    %8 = vsyncpa [#allocation4], 0
    %9 = vsyncpa [#allocation5], 0
    // Predicated region
    $region2: #{tpu_custom_call.1} parent=1 // pred_check
      _
    $region3: #{tpu_custom_call.1} parent=1 // pred_check_branch
      %11 = sbr.rel (0) target = $region5
    $region4: #{tpu_custom_call.1} parent=1 // pred_region
      %s12 = sadd.s32 0, 0
      %p13 = scmp.lt.s32.totalorder %s12, 0
      %s14 = scalar_select %p13, %s12, 0
      %s15 = smul.addr %s14, 2
      %s16 = scalar_lea.vmem %s0, %s15
      %s17 = sadd.s32 0, 0
    $region5: #{tpu_custom_call.1} parent=1 // pred_fallthru
      _
    // Predicated region
    $region6: #{tpu_custom_call.1} parent=1 // pred_check
      _
    $region7: #{tpu_custom_call.1} parent=1 // pred_check_branch
      %19 = sbr.rel (0) target = $region9
    $region8: #{tpu_custom_call.1} parent=1 // pred_region
      %s20 = sadd.s32 0, 0
      %p21 = scmp.lt.s32.totalorder %s20, 0
      %s22 = scalar_select %p21, %s20, 0
      %s23 = smul.addr %s22, 2
      %s24 = scalar_lea.vmem %s1, %s23
      %s25 = sadd.s32 0, 0
    $region9: #{tpu_custom_call.1} parent=1 // pred_fallthru
      _
    // Predicated region
    $region10: #{tpu_custom_call.1} parent=1 // pred_check
      _
    $region11: #{tpu_custom_call.1} parent=1 // pred_check_branch
      %27 = sbr.rel (0) target = $region13
    $region12: #{tpu_custom_call.1} parent=1 // pred_region
      %s28 = sadd.s32 0, 0
      %s29 = smul.u32 2, %s28
      %31 = vsyncadd [#allocation4], 0
      %s32 = smul.addr %s29, 8
      %s33 = smul.addr %s32, 8
      %s34 = scalar_lea.hbm %s2, %s33
      %s35 = sshll.u32 %s34, 4
      %s36 = int_to_ptr.hbm [resolvable:$true] %s35
      %s37 = sshll.u32 [#allocation3], 4
      %s38 = int_to_ptr.vmem [resolvable:$true] %s37
      %43 = dma.hbm_to_vmem [thread:$0]  %s36, 2048, %s38, [#allocation4], 128, 128, 8
    $region13: #{tpu_custom_call.1} parent=1 // pred_fallthru
      _
    // Predicated region
    $region14: #{tpu_custom_call.1} parent=1 // pred_check
      _
    $region15: #{tpu_custom_call.1} parent=1 // pred_check_branch
      %45 = sbr.rel (0) target = $region17
    $region16: #{tpu_custom_call.1} parent=1 // pred_region
      %47 = dma.done [#allocation4], 2048
    $region17: #{tpu_custom_call.1} parent=1 // pred_fallthru
      _
    %s48 = sadd.s32 0, 0
    %p49 = scmp.lt.s32.totalorder %s48, 0
    %s50 = scalar_select %p49, %s48, 0
    %s51 = smul.addr %s50, 2
    %s52 = scalar_lea.vmem %s0, %s51
    %s53 = sadd.s32 0, 0
    %p54 = scmp.lt.s32.totalorder %s53, 0
    %s55 = scalar_select %p54, %s53, 0
    %s56 = smul.addr %s55, 2
    %s57 = scalar_lea.vmem %s1, %s56
    %s58 = sadd.s32 0, 0
    %p59 = scmp.lt.s32.totalorder %s58, 0
    %s60 = scalar_select %p59, %s58, 0
    %s61 = smul.addr %s60, 2
    %s62 = scalar_lea.vmem %s0, %s61
    %s63 = sadd.s32 0, 0
    %s64 = sadd.s32 0, 0
    %p65 = scmp.lt.s32.totalorder %s64, 0
    %s66 = scalar_select %p65, %s64, 0
    %s67 = smul.addr %s66, 2
    %s68 = scalar_lea.vmem %s1, %s67
    %s69 = sadd.s32 0, 0
    %s70 = sadd.s32 0, 0
    %s71 = smul.u32 2, %s70
    %s72 = sadd.s32 0, 0
    %s73 = smul.u32 %s72, 2
    %p74 = scmp.eq.s32.totalorder 0, 0
    // Predicated region
    $region18: #{tpu_custom_call.1} parent=1 // pred_check
      %p75 = pneg %p74
    $region19: #{tpu_custom_call.1} parent=1 // pred_check_branch
      %77 = sbr.rel (%p75) target = $region21
    $region20: #{tpu_custom_call.1} parent=1 // pred_region
      %78 = vst [vmem:[#allocation2] sm:$0x1] 0.0
    $region21: #{tpu_custom_call.1} parent=1 // pred_fallthru
      _
    %v79 = vld [vmem:[%s62] sm:$0x3]
    %v80 = vld [vmem:[%s68] sm:$0x3]
    %v81 = vlaneseq
    %v82 = vand.u32 %v81, 127
    %83 = vset.pattern.permute.xlu0 0
    %84 = vperm.xlu0 %83, %v80
    %v85 = vpop.permute.xlu0 %84
    %vm86 = vcmp.eq.s32.totalorder %v82, %v85
    %v87 = vsel %vm86, 1, 0
    %v88 = vcvt.s32.f32 %v87
    %v89 = vlog2.pop %v79
    %v90 = vmul.f32 %v89, 0.6931472
    %v91 = vmax.f32 %v90, -100.0
    %v92 = vsub.f32 1.0, %v79
    %v93 = vlog2.pop %v92
    %v94 = vmul.f32 %v93, 0.6931472
    %v95 = vmax.f32 %v94, -100.0
    %v96 = vmul.f32 %v88, %v91
    %v97 = vsub.f32 1.0, %v88
    %v98 = vmul.f32 %v97, %v95
    %v99 = vadd.f32 %v96, %v98
    %v100 = vsub.f32 0.0, %v99
    %v101 = vlaneseq
    %v102 = vshrl.u32 %v101, 7
    %v103 = vstv %s73
    %v104 = vadd.s32 %v103, %v102
    %vm105 = vcmp.lt.s32.totalorder %v104, 2
    %v106 = vsel %vm105, 1, 0
    %vm107 = vcmp.eq.s32.totalorder %v106, 1
    %v108 = vsel %vm107, %v100, 0.0
    %vm109 = vcmask 156672
    %v110 = vsel %vm109, %v108, 0.0
    %111 = vadd.xlane.f32.xlu0 %v110
    %v112 = vpop.xlane.xlu0 %111
    %v113 = vrot.slane %v112, 4
    %v114 = vadd.f32 %v112, %v113
    %v115 = vrot.slane %v114, 2
    %v116 = vadd.f32 %v114, %v115
    %v117 = vrot.slane %v116, 1
    %v118 = vadd.f32 %v116, %v117
    %s119 = vtos %v118
    %s120 = smul.u32 0, 64
    %s121 = scalar_lea.vmem [#allocation3], %s120
    %v122 = vld [vmem:[%s121] sm:$0xff]
    %v123 = vld [vmem:[%s121 + $0x8] sm:$0xff]
    %v124 = vld [vmem:[%s121 + $0x10] sm:$0xff]
    %v125 = vld [vmem:[%s121 + $0x18] sm:$0xff]
    %v126 = vld [vmem:[%s121 + $0x20] sm:$0xff]
    %v127 = vld [vmem:[%s121 + $0x28] sm:$0xff]
    %v128 = vld [vmem:[%s121 + $0x30] sm:$0xff]
    %v129 = vld [vmem:[%s121 + $0x38] sm:$0xff]
    %v130 = vld [vmem:[%s121 + $0x40] sm:$0xff]
    %v131 = vld [vmem:[%s121 + $0x48] sm:$0xff]
    %v132 = vld [vmem:[%s121 + $0x50] sm:$0xff]
    %v133 = vld [vmem:[%s121 + $0x58] sm:$0xff]
    %v134 = vld [vmem:[%s121 + $0x60] sm:$0xff]
    %v135 = vld [vmem:[%s121 + $0x68] sm:$0xff]
    %v136 = vld [vmem:[%s121 + $0x70] sm:$0xff]
    %v137 = vld [vmem:[%s121 + $0x78] sm:$0xff]
    %vm138 = vcmask 523264
    %v140 = vsel %vm138, %v122, 0
    %v143 = vsel %vm138, %v123, 0
    %v146 = vsel %vm138, %v124, 0
    %v149 = vsel %vm138, %v125, 0
    %v152 = vsel %vm138, %v126, 0
    %v155 = vsel %vm138, %v127, 0
    %v158 = vsel %vm138, %v128, 0
    %v161 = vsel %vm138, %v129, 0
    %163 = vmatpush.xpose.msra.mxu0 0.0
    %164 = vmatpush.xpose.msra.mxu0 0.0
    %165 = vmatpush.xpose.msra.mxu0 0.0
    %166 = vmatpush.xpose.msra.mxu0 0.0
    %167 = vmatpush.xpose.msra.mxu0 0.0
    %168 = vmatpush.xpose.msra.mxu0 0.0
    %169 = vmatpush.xpose.msra.mxu0 0.0
    %170 = vmatpush.xpose.msra.mxu0 0.0
    %171 = vmatpush.xpose.msra.mxu0 %v161
    %172 = vmatpush.xpose.msra.mxu0 %v158
    %173 = vmatpush.xpose.msra.mxu0 %v155
    %174 = vmatpush.xpose.msra.mxu0 %v152
    %175 = vmatpush.xpose.msra.mxu0 %v149
    %176 = vmatpush.xpose.msra.mxu0 %v146
    %177 = vmatpush.xpose.msra.mxu0 %v143
    %178 = vmatpush.xpose.msra.mxu0 %v140
    %179 = vmatmul.f32.gmra.mxu0 %v140
    %v180 = vpop.f32.mrf.mxu0
    %v181 = vadd.f32 0.0, %v180
    %182 = vmatmul.f32.gmra.mxu0 %v143
    %v183 = vpop.f32.mrf.mxu0
    %v184 = vadd.f32 0.0, %v183
    %185 = vmatmul.f32.gmra.mxu0 %v146
    %v186 = vpop.f32.mrf.mxu0
    %v187 = vadd.f32 0.0, %v186
    %188 = vmatmul.f32.gmra.mxu0 %v149
    %v189 = vpop.f32.mrf.mxu0
    %v190 = vadd.f32 0.0, %v189
    %191 = vmatmul.f32.gmra.mxu0 %v152
    %v192 = vpop.f32.mrf.mxu0
    %v193 = vadd.f32 0.0, %v192
    %194 = vmatmul.f32.gmra.mxu0 %v155
    %v195 = vpop.f32.mrf.mxu0
    %v196 = vadd.f32 0.0, %v195
    %197 = vmatmul.f32.gmra.mxu0 %v158
    %v198 = vpop.f32.mrf.mxu0
    %v199 = vadd.f32 0.0, %v198
    %200 = vmatmul.f32.gmra.mxu0 %v161
    %v201 = vpop.f32.mrf.mxu0
    %v202 = vadd.f32 0.0, %v201
    %203 = vdwg.mxu0
    %v205 = vsel %vm138, %v130, 0
    %v208 = vsel %vm138, %v131, 0
    %v211 = vsel %vm138, %v132, 0
    %v214 = vsel %vm138, %v133, 0
    %v217 = vsel %vm138, %v134, 0
    %v220 = vsel %vm138, %v135, 0
    %v223 = vsel %vm138, %v136, 0
    %v226 = vsel %vm138, %v137, 0
    %228 = vmatpush.xpose.msra.mxu0 0.0
    %229 = vmatpush.xpose.msra.mxu0 0.0
    %230 = vmatpush.xpose.msra.mxu0 0.0
    %231 = vmatpush.xpose.msra.mxu0 0.0
    %232 = vmatpush.xpose.msra.mxu0 0.0
    %233 = vmatpush.xpose.msra.mxu0 0.0
    %234 = vmatpush.xpose.msra.mxu0 0.0
    %235 = vmatpush.xpose.msra.mxu0 0.0
    %236 = vmatpush.xpose.msra.mxu0 %v226
    %237 = vmatpush.xpose.msra.mxu0 %v223
    %238 = vmatpush.xpose.msra.mxu0 %v220
    %239 = vmatpush.xpose.msra.mxu0 %v217
    %240 = vmatpush.xpose.msra.mxu0 %v214
    %241 = vmatpush.xpose.msra.mxu0 %v211
    %242 = vmatpush.xpose.msra.mxu0 %v208
    %243 = vmatpush.xpose.msra.mxu0 %v205
    %244 = vmatmul.f32.gmra.mxu0 %v205
    %v245 = vpop.f32.mrf.mxu0
    %v246 = vadd.f32 0.0, %v245
    %247 = vmatmul.f32.gmra.mxu0 %v208
    %v248 = vpop.f32.mrf.mxu0
    %v249 = vadd.f32 0.0, %v248
    %250 = vmatmul.f32.gmra.mxu0 %v211
    %v251 = vpop.f32.mrf.mxu0
    %v252 = vadd.f32 0.0, %v251
    %253 = vmatmul.f32.gmra.mxu0 %v214
    %v254 = vpop.f32.mrf.mxu0
    %v255 = vadd.f32 0.0, %v254
    %256 = vmatmul.f32.gmra.mxu0 %v217
    %v257 = vpop.f32.mrf.mxu0
    %v258 = vadd.f32 0.0, %v257
    %259 = vmatmul.f32.gmra.mxu0 %v220
    %v260 = vpop.f32.mrf.mxu0
    %v261 = vadd.f32 0.0, %v260
    %262 = vmatmul.f32.gmra.mxu0 %v223
    %v263 = vpop.f32.mrf.mxu0
    %v264 = vadd.f32 0.0, %v263
    %265 = vmatmul.f32.gmra.mxu0 %v226
    %v266 = vpop.f32.mrf.mxu0
    %v267 = vadd.f32 0.0, %v266
    %268 = vdwg.mxu0
    %v269 = vmul.f32 %v181, %v181
    %v270 = vmul.f32 %v184, %v184
    %v271 = vmul.f32 %v187, %v187
    %v272 = vmul.f32 %v190, %v190
    %v273 = vmul.f32 %v193, %v193
    %v274 = vmul.f32 %v196, %v196
    %v275 = vmul.f32 %v199, %v199
    %v276 = vmul.f32 %v202, %v202
    %v277 = vmul.f32 %v246, %v246
    %v278 = vmul.f32 %v249, %v249
    %v279 = vmul.f32 %v252, %v252
    %v280 = vmul.f32 %v255, %v255
    %v281 = vmul.f32 %v258, %v258
    %v282 = vmul.f32 %v261, %v261
    %v283 = vmul.f32 %v264, %v264
    %v284 = vmul.f32 %v267, %v267
    %v285 = vsel %vm138, %v269, 0.0
    %286 = vadd.xlane.f32.xlu0 %v285
    %v287 = vpop.xlane.xlu0 %286
    %v288 = vsel %vm138, %v270, 0.0
    %289 = vadd.xlane.f32.xlu0 %v288
    %v290 = vpop.xlane.xlu0 %289
    %v291 = vsel %vm138, %v271, 0.0
    %292 = vadd.xlane.f32.xlu0 %v291
    %v293 = vpop.xlane.xlu0 %292
    %v294 = vsel %vm138, %v272, 0.0
    %295 = vadd.xlane.f32.xlu0 %v294
    %v296 = vpop.xlane.xlu0 %295
    %v297 = vsel %vm138, %v273, 0.0
    %298 = vadd.xlane.f32.xlu0 %v297
    %v299 = vpop.xlane.xlu0 %298
    %v300 = vsel %vm138, %v274, 0.0
    %301 = vadd.xlane.f32.xlu0 %v300
    %v302 = vpop.xlane.xlu0 %301
    %v303 = vsel %vm138, %v275, 0.0
    %304 = vadd.xlane.f32.xlu0 %v303
    %v305 = vpop.xlane.xlu0 %304
    %v306 = vsel %vm138, %v276, 0.0
    %307 = vadd.xlane.f32.xlu0 %v306
    %v308 = vpop.xlane.xlu0 %307
    %v309 = vsel %vm138, %v277, 0.0
    %310 = vadd.xlane.f32.xlu0 %v309
    %v311 = vpop.xlane.xlu0 %310
    %v312 = vsel %vm138, %v278, 0.0
    %313 = vadd.xlane.f32.xlu0 %v312
    %v314 = vpop.xlane.xlu0 %313
    %v315 = vsel %vm138, %v279, 0.0
    %316 = vadd.xlane.f32.xlu0 %v315
    %v317 = vpop.xlane.xlu0 %316
    %v318 = vsel %vm138, %v280, 0.0
    %319 = vadd.xlane.f32.xlu0 %v318
    %v320 = vpop.xlane.xlu0 %319
    %v321 = vsel %vm138, %v281, 0.0
    %322 = vadd.xlane.f32.xlu0 %v321
    %v323 = vpop.xlane.xlu0 %322
    %v324 = vsel %vm138, %v282, 0.0
    %325 = vadd.xlane.f32.xlu0 %v324
    %v326 = vpop.xlane.xlu0 %325
    %v327 = vsel %vm138, %v283, 0.0
    %328 = vadd.xlane.f32.xlu0 %v327
    %v329 = vpop.xlane.xlu0 %328
    %v330 = vsel %vm138, %v284, 0.0
    %331 = vadd.xlane.f32.xlu0 %v330
    %v332 = vpop.xlane.xlu0 %331
    %v349 = vperm.slane %v287, %v82
    %v350 = vadd.s32 %v82, 4294967288
    %v351 = vperm.slane %v290, %v350
    %vm352 = vcmask 130112
    %v353 = vsel %vm352, %v351, %v349
    %v354 = vadd.s32 %v82, 4294967280
    %v355 = vperm.slane %v293, %v354
    %vm356 = vcmask 195712
    %v357 = vsel %vm356, %v355, %v353
    %v358 = vadd.s32 %v82, 4294967272
    %v359 = vperm.slane %v296, %v358
    %vm360 = vcmask 261312
    %v361 = vsel %vm360, %v359, %v357
    %v362 = vadd.s32 %v82, 4294967264
    %v363 = vperm.slane %v299, %v362
    %vm364 = vcmask 326912
    %v365 = vsel %vm364, %v363, %v361
    %v366 = vadd.s32 %v82, 4294967256
    %v367 = vperm.slane %v302, %v366
    %vm368 = vcmask 392512
    %v369 = vsel %vm368, %v367, %v365
    %v370 = vadd.s32 %v82, 4294967248
    %v371 = vperm.slane %v305, %v370
    %vm372 = vcmask 458112
    %v373 = vsel %vm372, %v371, %v369
    %v374 = vadd.s32 %v82, 4294967240
    %v375 = vperm.slane %v308, %v374
    %vm376 = vcmask 523712
    %v377 = vsel %vm376, %v375, %v373
    %v378 = vperm.slane %v311, %v82
    %v379 = vperm.slane %v314, %v350
    %v380 = vsel %vm352, %v379, %v378
    %v381 = vperm.slane %v317, %v354
    %v382 = vsel %vm356, %v381, %v380
    %v383 = vperm.slane %v320, %v358
    %v384 = vsel %vm360, %v383, %v382
    %v385 = vperm.slane %v323, %v362
    %v386 = vsel %vm364, %v385, %v384
    %v387 = vperm.slane %v326, %v366
    %v388 = vsel %vm368, %v387, %v386
    %v389 = vperm.slane %v329, %v370
    %v390 = vsel %vm372, %v389, %v388
    %v391 = vperm.slane %v332, %v374
    %v392 = vsel %vm376, %v391, %v390
    %vm393 = vcmask 1041409
    %v394 = vsel %vm393, %v392, %v377
    %vm396 = vcmask 517120
    %v397 = vsel %vm396, %v394, 0.0
    %398 = vadd.xlane.f32.xlu0 %v397
    %v399 = vpop.xlane.xlu0 %398
    %v400 = vmul.f32 %v122, %v122
    %v401 = vmul.f32 %v123, %v123
    %v402 = vmul.f32 %v124, %v124
    %v403 = vmul.f32 %v125, %v125
    %v404 = vmul.f32 %v126, %v126
    %v405 = vmul.f32 %v127, %v127
    %v406 = vmul.f32 %v128, %v128
    %v407 = vmul.f32 %v129, %v129
    %v408 = vmul.f32 %v130, %v130
    %v409 = vmul.f32 %v131, %v131
    %v410 = vmul.f32 %v132, %v132
    %v411 = vmul.f32 %v133, %v133
    %v412 = vmul.f32 %v134, %v134
    %v413 = vmul.f32 %v135, %v135
    %v414 = vmul.f32 %v136, %v136
    %v415 = vmul.f32 %v137, %v137
    %v416 = vsel %vm138, %v400, 0.0
    %417 = vadd.xlane.f32.xlu0 %v416
    %v418 = vpop.xlane.xlu0 %417
    %v419 = vsel %vm138, %v401, 0.0
    %420 = vadd.xlane.f32.xlu0 %v419
    %v421 = vpop.xlane.xlu0 %420
    %v422 = vsel %vm138, %v402, 0.0
    %423 = vadd.xlane.f32.xlu0 %v422
    %v424 = vpop.xlane.xlu0 %423
    %v425 = vsel %vm138, %v403, 0.0
    %426 = vadd.xlane.f32.xlu0 %v425
    %v427 = vpop.xlane.xlu0 %426
    %v428 = vsel %vm138, %v404, 0.0
    %429 = vadd.xlane.f32.xlu0 %v428
    %v430 = vpop.xlane.xlu0 %429
    %v431 = vsel %vm138, %v405, 0.0
    %432 = vadd.xlane.f32.xlu0 %v431
    %v433 = vpop.xlane.xlu0 %432
    %v434 = vsel %vm138, %v406, 0.0
    %435 = vadd.xlane.f32.xlu0 %v434
    %v436 = vpop.xlane.xlu0 %435
    %v437 = vsel %vm138, %v407, 0.0
    %438 = vadd.xlane.f32.xlu0 %v437
    %v439 = vpop.xlane.xlu0 %438
    %v440 = vsel %vm138, %v408, 0.0
    %441 = vadd.xlane.f32.xlu0 %v440
    %v442 = vpop.xlane.xlu0 %441
    %v443 = vsel %vm138, %v409, 0.0
    %444 = vadd.xlane.f32.xlu0 %v443
    %v445 = vpop.xlane.xlu0 %444
    %v446 = vsel %vm138, %v410, 0.0
    %447 = vadd.xlane.f32.xlu0 %v446
    %v448 = vpop.xlane.xlu0 %447
    %v449 = vsel %vm138, %v411, 0.0
    %450 = vadd.xlane.f32.xlu0 %v449
    %v451 = vpop.xlane.xlu0 %450
    %v452 = vsel %vm138, %v412, 0.0
    %453 = vadd.xlane.f32.xlu0 %v452
    %v454 = vpop.xlane.xlu0 %453
    %v455 = vsel %vm138, %v413, 0.0
    %456 = vadd.xlane.f32.xlu0 %v455
    %v457 = vpop.xlane.xlu0 %456
    %v458 = vsel %vm138, %v414, 0.0
    %459 = vadd.xlane.f32.xlu0 %v458
    %v460 = vpop.xlane.xlu0 %459
    %v461 = vsel %vm138, %v415, 0.0
    %462 = vadd.xlane.f32.xlu0 %v461
    %v463 = vpop.xlane.xlu0 %462
    %v480 = vperm.slane %v418, %v82
    %v481 = vperm.slane %v421, %v350
    %v482 = vsel %vm352, %v481, %v480
    %v483 = vperm.slane %v424, %v354
    %v484 = vsel %vm356, %v483, %v482
    %v485 = vperm.slane %v427, %v358
    %v486 = vsel %vm360, %v485, %v484
    %v487 = vperm.slane %v430, %v362
    %v488 = vsel %vm364, %v487, %v486
    %v489 = vperm.slane %v433, %v366
    %v490 = vsel %vm368, %v489, %v488
    %v491 = vperm.slane %v436, %v370
    %v492 = vsel %vm372, %v491, %v490
    %v493 = vperm.slane %v439, %v374
    %v494 = vsel %vm376, %v493, %v492
    %v495 = vperm.slane %v442, %v82
    %v496 = vperm.slane %v445, %v350
    %v497 = vsel %vm352, %v496, %v495
    %v498 = vperm.slane %v448, %v354
    %v499 = vsel %vm356, %v498, %v497
    %v500 = vperm.slane %v451, %v358
    %v501 = vsel %vm360, %v500, %v499
    %v502 = vperm.slane %v454, %v362
    %v503 = vsel %vm364, %v502, %v501
    %v504 = vperm.slane %v457, %v366
    %v505 = vsel %vm368, %v504, %v503
    %v506 = vperm.slane %v460, %v370
    %v507 = vsel %vm372, %v506, %v505
    %v508 = vperm.slane %v463, %v374
    %v509 = vsel %vm376, %v508, %v507
    %v510 = vsel %vm393, %v509, %v494
    %v512 = vsel %vm396, %v510, 0.0
    %513 = vadd.xlane.f32.xlu0 %v512
    %v514 = vpop.xlane.xlu0 %513
    %v515 = vmul.f32 %v514, 2.0
    %v516 = vsub.f32 %v399, %v515
    %v517 = vadd.f32 %v516, 64.0
    %v518 = vmax.f32 %v517, 0.0
    %v519 = vrsqrt.pop %v518
    %v520 = vmul.f32 %v519, %v518
    %v521 = vmul.f32 %v520, %v519
    %v522 = vmul.f32 0.5, %v521
    %v523 = vsub.f32 1.5, %v522
    %v524 = vmul.f32 %v519, %v523
    %v525 = vmul.f32 %v518, %v524
    %vm526 = vcmp.eq.f32.partialorder %v518, inf
    %v527 = vsel %vm526, %v518, %v525
    %vm528 = vcmp.eq.f32.partialorder %v518, 0.0
    %v529 = vand.u32 %v518, 2147483648
    %v530 = vsel %vm528, %v529, %v527
    %s531 = sadd.s32 %s73, 0
    %v532 = vstv %s531
    %v533 = vadd.s32 %v532, %v102
    %vm534 = vcmp.lt.s32.totalorder %v533, 2
    %v535 = vsel %vm534, %v530, 0.0
    %vm536 = vcmask 1024
    %v537 = vsel %vm536, %v535, 0.0
    %538 = vadd.xlane.f32.xlu0 %v537
    %v539 = vpop.xlane.xlu0 %538
    %v540 = vrot.slane %v539, 4
    %v541 = vadd.f32 %v539, %v540
    %v542 = vrot.slane %v541, 2
    %v543 = vadd.f32 %v541, %v542
    %v544 = vrot.slane %v543, 1
    %v545 = vadd.f32 %v543, %v544
    %s546 = vtos %v545
    %s547 = sadd.f32 %s546, 0.0
    %v548 = vld [vmem:[#allocation2] sm:$0x1]
    %vm549 = vcmp.eq.s32.totalorder %v82, 0
    %v550 = vstv %s119
    %v551 = vsel %vm549, %v550, 0.0
    %vm552 = vcmp.eq.s32.totalorder %v82, 1
    %v553 = vstv %s547
    %v554 = vsel %vm552, %v553, 0.0
    %v555 = vadd.f32 %v551, %v554
    %v556 = vadd.f32 %v548, %v555
    %557 = vst [vmem:[#allocation2] sm:$0x1] %v556
    // Predicated region
    $region22: #{tpu_custom_call.1} parent=1 // pred_check
      %p558 = pneg %p74
    $region23: #{tpu_custom_call.1} parent=1 // pred_check_branch
      %560 = sbr.rel (%p558) target = $region25
    $region24: #{tpu_custom_call.1} parent=1 // pred_region
      %v561 = vld [vmem:[#allocation2] sm:$0x1]
      %562 = vst [vmem:[#allocation6] sm:$0x1] %v561
    $region25: #{tpu_custom_call.1} parent=1 // pred_fallthru
      _
    // Predicated region
    $region26: #{tpu_custom_call.1} parent=1 // pred_check
      _
    $region27: #{tpu_custom_call.1} parent=1 // pred_check_branch
      %564 = sbr.rel (0) target = $region29
    $region28: #{tpu_custom_call.1} parent=1 // pred_region
      %566 = vsyncadd [#allocation5], 0
      %s568 = sshll.u32 [#allocation6], 4
      %s569 = int_to_ptr.vmem [resolvable:$true] %s568
      %s570 = sshll.u32 %s3, 4
      %s571 = int_to_ptr.hbm [resolvable:$true] %s570
      %573 = dma.vmem_to_hbm [thread:$0]  %s569, 16, %s571, [#allocation5]
    $region29: #{tpu_custom_call.1} parent=1 // pred_fallthru
      _
    // Predicated region
    $region30: #{tpu_custom_call.1} parent=1 // pred_check
      _
    $region31: #{tpu_custom_call.1} parent=1 // pred_check_branch
      %575 = sbr.rel (0) target = $region33
    $region32: #{tpu_custom_call.1} parent=1 // pred_region
      %577 = dma.done [#allocation5], 16
    $region33: #{tpu_custom_call.1} parent=1 // pred_fallthru
      _
    %578 = vsyncpa [#allocation4], 1
    %579 = vsyncpa [#allocation5], 1

</llo_original>
